<compile_context>
chip_gen: v7x
topology: tpu7x:2x2x1
jax: 0.10.0
libtpu: 0.0.40
codegen_flags: <defaults>
</compile_context>

<pallas_src>
import functools
import math

import jax
import jax.numpy as jnp
from jax import lax
from jax.experimental import pallas as pl
from jax.experimental.pallas import tpu as pltpu


def _lora_kernel(x_ref, wd_ref, wu_t_ref, o_ref, *, scaling, compute_dtype):
    # x_ref:    (TM, E)  activation row tile (streamed)
    # wd_ref:   (R, E)   lora_down weight, native nn.Linear layout (lane-dense)
    # wu_t_ref: (R, E)   lora_up weight transposed once in the wrapper (lane-dense)
    x = x_ref[...]
    if x.dtype != compute_dtype:
        # bf16 MXU path for f32 activations; accumulation stays f32.
        x = x.astype(compute_dtype)
    # down = x @ W_down^T  -- contract the shared E axis directly (no transpose).
    down = lax.dot_general(
        x,
        wd_ref[...],
        dimension_numbers=(((1,), (1,)), ((), ())),
        preferred_element_type=jnp.float32,
    )  # (TM, R), f32 accumulate
    # Apply scaling on the tiny (TM, R) intermediate (E/R x fewer VPU mults),
    # then drop back to the compute dtype so the second matmul uses the native
    # low-precision MXU path.
    down = (down * scaling).astype(compute_dtype)
    up = jnp.dot(down, wu_t_ref[...], preferred_element_type=jnp.float32)  # (TM, E)
    o_ref[...] = up.astype(o_ref.dtype)


def _round_up(n, m):
    return ((n + m - 1) // m) * m


def _vmem_capacity_bytes():
    """Physical per-core VMEM; conservative v7x default if the query fails."""
    try:
        return int(pltpu.get_tpu_info().vmem_capacity_bytes)
    except Exception:
        return 64 * 1024 * 1024


def _choose_tm(M, E, in_item, out_item, cast_extra, budget):
    """Row-tile size: biggest tile whose VMEM footprint fits `budget`.

    Footprint per row of tile: 2 x-buffers, 2 out-buffers, the f32 `up`
    intermediate, and (if the activations are cast) the cast temp.
    """
    align = 16 if in_item <= 2 else 8  # sublane packing (bf16 / f32)
    if M <= align:
        return max(int(M), 1)          # single full-extent block is always legal
    per_row = E * (2 * in_item + 2 * out_item + 4 + cast_extra)
    tm = budget // max(per_row, 1)
    tm = max(align, min(2048, (tm // align) * align))
    # Ensure >=2 grid steps: shards across v7x's 2 TensorCores and gives the
    # pipeline something to double-buffer.  (On v5e/v6e the larger budget
    # keeps TM >= 512 for realistic M, E.)
    two_step = _round_up(pl.cdiv(M, 2), align)
    tm = min(tm, max(align, two_step))
    return int(tm)


def lora_linear_v2(x, w_down, w_up, *, alpha=1, rank=None, use_bf16_matmul=True):
    """x: (..., E); w_down: (R, E); w_up: (E, R)  (PyTorch nn.Linear layout)."""
    E = x.shape[-1]
    R = w_down.shape[0]
    if rank is None:
        rank = R
    assert rank == R, f"rank ({rank}) must match w_down.shape[0] ({R})"
    assert w_down.shape == (R, E), f"w_down shape {w_down.shape} != {(R, E)}"
    assert w_up.shape == (E, R), f"w_up shape {w_up.shape} != {(E, R)}"
    scaling = float(alpha) / float(rank)

    orig_shape = x.shape
    M = math.prod(orig_shape[:-1]) if len(orig_shape) > 1 else 1
    x2d = x.reshape(M, E)

    in_item = jnp.dtype(x.dtype).itemsize
    out_item = in_item  # output matches the activation dtype
    if in_item < 4:
        compute_dtype = jnp.dtype(x.dtype)
    elif use_bf16_matmul:
        compute_dtype = jnp.dtype(jnp.bfloat16)
    else:
        compute_dtype = jnp.dtype(jnp.float32)
    comp_item = compute_dtype.itemsize

    # w_down stays (R, E) (lane-dense); w_up is transposed once to (R, E).
    # Cast both tiny weights to the compute dtype so the MXU path is homogeneous.
    wd = w_down.astype(compute_dtype)
    wu_t = w_up.T.astype(compute_dtype)

    # Generation-aware VMEM accounting.
    vmem_cap = _vmem_capacity_bytes()
    vmem_limit = (vmem_cap * 3) // 4          # ~48 MiB v7x, ~96 MiB v5e/v6e
    weights_bytes = 2 * R * E * comp_item     # single-buffered, VMEM-resident
    headroom = 6 * 1024 * 1024                # Mosaic internal scratch, misc
    budget = max(vmem_limit - weights_bytes - headroom, 4 * 1024 * 1024)
    cast_extra = comp_item if compute_dtype != jnp.dtype(x.dtype) else 0
    tm = _choose_tm(M, E, in_item, out_item, cast_extra, budget)

    cost = pl.CostEstimate(
        flops=4 * M * E * R,
        bytes_accessed=M * E * (in_item + out_item) + 2 * R * E * comp_item,
        transcendentals=0,
    )

    out = pl.pallas_call(
        functools.partial(_lora_kernel, scaling=scaling, compute_dtype=compute_dtype),
        out_shape=jax.ShapeDtypeStruct((M, E), x.dtype),
        grid=(pl.cdiv(M, tm),),  # ragged last block is masked by Pallas
        in_specs=[
            pl.BlockSpec((tm, E), lambda i: (i, 0)),            # x row tile (streamed)
            pl.BlockSpec(memory_space=pltpu.MemorySpace.VMEM),  # w_down: whole array, 1 buffer
            pl.BlockSpec(memory_space=pltpu.MemorySpace.VMEM),  # w_up^T: whole array, 1 buffer
        ],
        out_specs=pl.BlockSpec((tm, E), lambda i: (i, 0)),
        compiler_params=pltpu.CompilerParams(
            dimension_semantics=("parallel",),
            vmem_limit_bytes=int(vmem_limit),
        ),
        cost_estimate=cost,
    )(x2d, wd, wu_t)

    return out.reshape(orig_shape)


def init_lora_params(key, embed_dims, rank):
    """Deterministic parameter init matching LoRALinearv2.__init__."""
    # kaiming_uniform_(a=sqrt(5)) on lora_down.weight (shape (rank, embed_dims)):
    #   bound = sqrt(6 / ((1 + a^2) * fan_in)) = 1 / sqrt(fan_in), fan_in = embed_dims
    bound = 1.0 / math.sqrt(embed_dims)
    w_down = jax.random.uniform(
        key, (rank, embed_dims), minval=-bound, maxval=bound, dtype=jnp.float32
    )
    # nn.init.zeros_(lora_up.weight)  (shape (embed_dims, rank))
    w_up = jnp.zeros((embed_dims, rank), dtype=jnp.float32)
    return w_down, w_up


if __name__ == "__main__":
    key = jax.random.PRNGKey(0)
    k_x, k_wd, k_wu = jax.random.split(key, 3)

    batch, seq, embed_dims = 2, 8, 32
    rank, alpha = 4, 1

    x = jax.random.normal(k_x, (batch, seq, embed_dims), dtype=jnp.float32)

    # Module-faithful init (w_up = zeros) is available via init_lora_params;
    # use a random w_up here so the numeric checks are non-trivial.
    w_down, _ = init_lora_params(k_wd, embed_dims, rank)
    w_up = 0.02 * jax.random.normal(k_wu, (embed_dims, rank), dtype=jnp.float32)

    ref = (x @ w_down.T) @ w_up.T * (alpha / rank)

    # Default (bf16-MXU) path: loosened tolerance is the deliberate precision
    # trade from the perf review (f32 activations cast to bf16 on the MXU).
    y = jax.block_until_ready(
        lora_linear_v2(x, w_down, w_up, alpha=alpha, rank=rank)
    )
    assert y.shape == x.shape
    assert jnp.allclose(y, ref, atol=2e-3, rtol=2e-2), "bf16-MXU path mismatch"

    # Exact-f32 MXU path (use_bf16_matmul=False) keeps the original tolerance.
    y32 = jax.block_until_ready(
        lora_linear_v2(x, w_down, w_up, alpha=alpha, rank=rank, use_bf16_matmul=False)
    )
    assert jnp.allclose(y32, ref, atol=1e-5), "f32 path mismatch"

    # Ragged last row-block (M = 21 not a multiple of TM) — exercises the
    # masked boundary write that replaced the old pad/slice.
    x_ragged = jax.random.normal(k_x, (3, 7, embed_dims), dtype=jnp.float32)
    ref_ragged = (x_ragged @ w_down.T) @ w_up.T * (alpha / rank)
    y_ragged = jax.block_until_ready(
        lora_linear_v2(x_ragged, w_down, w_up, alpha=alpha, rank=rank)
    )
    assert y_ragged.shape == x_ragged.shape
    assert jnp.allclose(y_ragged, ref_ragged, atol=2e-3, rtol=2e-2), "ragged-M mismatch"

    # bf16 activations with f32 weights: weights are cast once in the wrapper,
    # both matmuls stay on the native bf16 MXU path.
    x_bf16 = x.astype(jnp.bfloat16)
    y_bf16 = jax.block_until_ready(
        lora_linear_v2(x_bf16, w_down, w_up, alpha=alpha, rank=rank)
    )
    assert y_bf16.dtype == jnp.bfloat16 and y_bf16.shape == x.shape
    assert jnp.allclose(y_bf16.astype(jnp.float32), ref, atol=1e-2, rtol=1e-1), \
        "bf16-activation path mismatch"

    # Module-faithful zero-init path (lora_up zeros) => output must be zero.
    w_up0 = jnp.zeros((embed_dims, rank), dtype=jnp.float32)
    y0 = jax.block_until_ready(
        lora_linear_v2(x, w_down, w_up0, alpha=alpha, rank=rank)
    )
    assert jnp.allclose(y0, jnp.zeros_like(y0), atol=1e-6)

    print("KERNEL_OK")
</pallas_src>

<mosaic_0001>
module attributes {stable_mosaic.version = 11 : i64} {
  func.func @_lora_kernel(%arg0: i32, %arg1: memref<8x32xf32, #tpu.memory_space<vmem>>, %arg2: memref<4x32xbf16, #tpu.memory_space<vmem>>, %arg3: memref<4x32xbf16, #tpu.memory_space<vmem>>, %arg4: memref<8x32xf32, #tpu.memory_space<vmem>>) attributes {dimension_semantics = [#tpu.dimension_semantics<parallel>], iteration_bounds = array<i64: 2>, scalar_prefetch = 0 : i64, scratch_operands = 0 : i64, tpu.core_type = #tpu.core_type<tc>, window_params = [{transform_indices = @transform_0, window_bounds = array<i64: 8, 32>}, {pipeline_mode = #tpu.pipeline_mode<synchronous>, transform_indices = @transform_1, window_bounds = array<i64: 4, 32>}, {pipeline_mode = #tpu.pipeline_mode<synchronous>, transform_indices = @transform_2, window_bounds = array<i64: 4, 32>}, {transform_indices = @transform_3, window_bounds = array<i64: 8, 32>}]} {
    %c0 = arith.constant 0 : index
    %c0_0 = arith.constant 0 : index
    %0 = vector.load %arg1[%c0, %c0_0] : memref<8x32xf32, #tpu.memory_space<vmem>>, vector<8x32xf32>
    %1 = arith.truncf %0 : vector<8x32xf32> to vector<8x32xbf16>
    %c0_1 = arith.constant 0 : index
    %c0_2 = arith.constant 0 : index
    %2 = vector.load %arg2[%c0_1, %c0_2] : memref<4x32xbf16, #tpu.memory_space<vmem>>, vector<4x32xbf16>
    %cst = arith.constant dense<0.000000e+00> : vector<8x4xf32>
    %3 = tpu.matmul %1, %2, %cst {dimension_numbers = #tpu.dot_dimension_numbers<[1], [1], [0], [0], [0, 0, 1, 0], [], []>} : vector<8x32xbf16>, vector<4x32xbf16>, vector<8x4xf32> -> vector<8x4xf32>
    %cst_3 = arith.constant 2.500000e-01 : f32
    %4 = vector.broadcast %cst_3 : f32 to vector<8x4xf32>
    %5 = arith.mulf %3, %4 : vector<8x4xf32>
    %6 = arith.truncf %5 : vector<8x4xf32> to vector<8x4xbf16>
    %c0_4 = arith.constant 0 : index
    %c0_5 = arith.constant 0 : index
    %7 = vector.load %arg3[%c0_4, %c0_5] : memref<4x32xbf16, #tpu.memory_space<vmem>>, vector<4x32xbf16>
    %cst_6 = arith.constant dense<0.000000e+00> : vector<8x32xf32>
    %8 = tpu.matmul %6, %7, %cst_6 {dimension_numbers = #tpu.dot_dimension_numbers<[1], [0], [0], [1], [0, 0, 1, 1], [], []>} : vector<8x4xbf16>, vector<4x32xbf16>, vector<8x32xf32> -> vector<8x32xf32>
    %c0_7 = arith.constant 0 : index
    %c0_8 = arith.constant 0 : index
    %9 = vector.load %arg4[%c0_7, %c0_8] : memref<8x32xf32, #tpu.memory_space<vmem>>, vector<8x32xf32>
    tpu.vector_store %arg4[%c0_7, %c0_8], %8 {strides = array<i32>} : memref<8x32xf32, #tpu.memory_space<vmem>>, vector<8x32xf32>,
    return
  }
  func.func @transform_0(%arg0: i32) -> (i32, i32) {
    %c0_i32 = arith.constant 0 : i32
    %c0_i32_0 = arith.constant 0 : i32
    return %arg0, %c0_i32 : i32, i32
  }
  func.func @transform_1(%arg0: i32) -> (i32, i32) {
    %c0_i32 = arith.constant 0 : i32
    %c0_i32_0 = arith.constant 0 : i32
    %c0_i32_1 = arith.constant 0 : i32
    return %c0_i32, %c0_i32_0 : i32, i32
  }
  func.func @transform_2(%arg0: i32) -> (i32, i32) {
    %c0_i32 = arith.constant 0 : i32
    %c0_i32_0 = arith.constant 0 : i32
    %c0_i32_1 = arith.constant 0 : i32
    return %c0_i32, %c0_i32_0 : i32, i32
  }
  func.func @transform_3(%arg0: i32) -> (i32, i32) {
    %c0_i32 = arith.constant 0 : i32
    %c0_i32_0 = arith.constant 0 : i32
    return %arg0, %c0_i32 : i32, i32
  }
}

</mosaic_0001>

<llo_original>
// kernel: tpu_custom_call.1
$region0: #{tpu_custom_call.1}
  #allocation0 [shape = 'u32[]', space=smem, size = 0x4, offset = 0x4, fixed_abs, tag = 'smem constant byte address 0x4 - core index']
  #allocation1 [shape = 'u32[144,128]{1,0:T(1,128)}', space=vmem, size = 0x12000, scoped, tag = 'internal scratch']
  %s0 = inlined_call_operand.hbm [shape: f32[16,32], index: 0, kind: input, shape index: {}]
  %s1 = inlined_call_operand.vmem [shape: bf16[4,32], index: 1, kind: input, shape index: {}]
  %s2 = inlined_call_operand.vmem [shape: bf16[4,32], index: 2, kind: input, shape index: {}]
  %s3 = inlined_call_operand.hbm [shape: f32[16,32], index: 3, kind: output, shape index: {}]
  %s4 = sld [smem:[#allocation0]]
  $region49: #{tpu_custom_call.1} parent=0
    _
  %s6 = ssub.s32 1, %s4
  %s7 = scalar_select 0, %s6, %s4
  $region1: #{tpu_custom_call.1} parent=0
    #allocation2 [shape = 'u8[8192]{0}', space=vmem, size = 0x2000, scoped, tag = 'input window, operand 0']
    #allocation3 [shape = 's32[2]{0}', space=sflag, size = 0x8, scoped, tag = 'scoped memory for tpu_custom_call.1']
    #allocation4 [shape = 's32[2]{0}', space=sflag, size = 0x8, scoped, tag = 'scoped memory for tpu_custom_call.1']
    #allocation5 [shape = 'u8[8192]{0}', space=vmem, size = 0x2000, scoped, tag = 'output window, operand 0']
    %8 = vsyncpa [#allocation3], 0
    %s9 = scalar_lea.sflag [#allocation3], 1
    %10 = vsyncpa %s9, 0
    %11 = vsyncpa [#allocation4], 0
    %s12 = scalar_lea.sflag [#allocation4], 1
    %13 = vsyncpa %s12, 0
    loop: start=0, step=1, limit=4
    $region2: #{tpu_custom_call.1} parent=1 // loop_pre_header
      _
    $region3: #{tpu_custom_call.1} parent=1 // loop_header
      %s15 = sphi 0, %s19
      %p16 = scmp.ge.s32.totalorder %s15, 4
      %s25 = sphi 0, %s27
      %s28 = sphi 0, %s25
      %s29 = sphi 0, %s28
      %s45 = sphi 0, %s29
      %s49 = sphi 0, %s49
      %s51 = sphi 0, %s49
      %s52 = sphi 0, %s51
      %s66 = sphi 0, %s52
      %s70 = sphi 0, %s70
      %s72 = sphi 0, %s70
      %s73 = sphi 0, %s72
      %s87 = sphi 0, %s73
      %s93 = sphi 0, %s95
      %s96 = sphi 0, %s93
      %s97 = sphi 0, %s96
      %s113 = sphi 0, %s97
    $region4: #{tpu_custom_call.1} parent=1 // loop_header_branch
      %18 = sbr.rel (%p16) target = $region8
    $region5: #{tpu_custom_call.1} parent=1 // loop_body
      %s20 = ssub.s32 %s15, 1
      %s21 = ssub.s32 %s15, 2
      %s22 = sadd.s32 %s15, 1
      %s23 = ssub.s32 %s15, %s22
      %p24 = scmp.eq.s32.totalorder %s23, 0
      %s26 = sadd.s32 %s25, 1
      %s27 = scalar_select %p24, %s25, %s26
      %p30 = pneg %p24
      %p31 = scmp.eq.s32.totalorder %s15, 1
      %p32 = por %p30, %p31
      %p33 = scmp.ne.s32.totalorder %s25, %s28
      %p34 = scmp.eq.s32.totalorder %s15, 0
      %p35 = por %p33, %p34
      %p36 = scmp.ne.s32.totalorder %s25, %s28
      %p37 = scmp.eq.s32.totalorder %s20, 1
      %p38 = por %p36, %p37
      %p39 = scmp.ne.s32.totalorder %s28, %s29
      %p40 = scmp.eq.s32.totalorder %s20, 0
      %p41 = por %p39, %p40
      %p42 = scmp.ne.s32.totalorder %s28, %s29
      %p43 = scmp.eq.s32.totalorder %s21, 1
      %p44 = por %p42, %p43
      %p46 = scmp.ne.s32.totalorder %s29, %s45
      %p47 = scmp.eq.s32.totalorder %s21, 0
      %p48 = por %p46, %p47
      %s50 = sadd.s32 %s49, 1
      %p53 = scmp.eq.s32.totalorder %s15, 1
      %p54 = scmp.ne.s32.totalorder %s49, %s51
      %p55 = scmp.eq.s32.totalorder %s15, 0
      %p56 = por %p54, %p55
      %p57 = scmp.ne.s32.totalorder %s49, %s51
      %p58 = scmp.eq.s32.totalorder %s20, 1
      %p59 = por %p57, %p58
      %p60 = scmp.ne.s32.totalorder %s51, %s52
      %p61 = scmp.eq.s32.totalorder %s20, 0
      %p62 = por %p60, %p61
      %p63 = scmp.ne.s32.totalorder %s51, %s52
      %p64 = scmp.eq.s32.totalorder %s21, 1
      %p65 = por %p63, %p64
      %p67 = scmp.ne.s32.totalorder %s52, %s66
      %p68 = scmp.eq.s32.totalorder %s21, 0
      %p69 = por %p67, %p68
      %s71 = sadd.s32 %s70, 1
      %p74 = scmp.eq.s32.totalorder %s15, 1
      %p75 = scmp.ne.s32.totalorder %s70, %s72
      %p76 = scmp.eq.s32.totalorder %s15, 0
      %p77 = por %p75, %p76
      %p78 = scmp.ne.s32.totalorder %s70, %s72
      %p79 = scmp.eq.s32.totalorder %s20, 1
      %p80 = por %p78, %p79
      %p81 = scmp.ne.s32.totalorder %s72, %s73
      %p82 = scmp.eq.s32.totalorder %s20, 0
      %p83 = por %p81, %p82
      %p84 = scmp.ne.s32.totalorder %s72, %s73
      %p85 = scmp.eq.s32.totalorder %s21, 1
      %p86 = por %p84, %p85
      %p88 = scmp.ne.s32.totalorder %s73, %s87
      %p89 = scmp.eq.s32.totalorder %s21, 0
      %p90 = por %p88, %p89
      %s91 = ssub.s32 %s15, %s22
      %p92 = scmp.eq.s32.totalorder %s91, 0
      %s94 = sadd.s32 %s93, 1
      %s95 = scalar_select %p92, %s93, %s94
      %p98 = pneg %p92
      %p99 = scmp.eq.s32.totalorder %s15, 1
      %p100 = por %p98, %p99
      %p101 = scmp.ne.s32.totalorder %s93, %s96
      %p102 = scmp.eq.s32.totalorder %s15, 0
      %p103 = por %p101, %p102
      %p104 = scmp.ne.s32.totalorder %s93, %s96
      %p105 = scmp.eq.s32.totalorder %s20, 1
      %p106 = por %p104, %p105
      %p107 = scmp.ne.s32.totalorder %s96, %s97
      %p108 = scmp.eq.s32.totalorder %s20, 0
      %p109 = por %p107, %p108
      %p110 = scmp.ne.s32.totalorder %s96, %s97
      %p111 = scmp.eq.s32.totalorder %s21, 1
      %p112 = por %p110, %p111
      %p114 = scmp.ne.s32.totalorder %s97, %s113
      %p115 = scmp.eq.s32.totalorder %s21, 0
      %p116 = por %p114, %p115
      %p117 = scmp.le.s32.totalorder 1, %s15
      %p118 = scmp.lt.s32.totalorder %s15, 3
      %p119 = pnand %p117, %p118
      %p120 = pneg %p119
      // Predicated region
      $region9: #{tpu_custom_call.1} parent=5 // pred_check
        _
      $region10: #{tpu_custom_call.1} parent=5 // pred_check_branch
        %122 = sbr.rel (%p119) target = $region12
      $region11: #{tpu_custom_call.1} parent=5 // pred_region
        %s123 = ssub.s32 %s15, 1
        // Predicated region
        $region13: #{tpu_custom_call.1} parent=11 // pred_check
          %p124 = pneg %p62
        $region14: #{tpu_custom_call.1} parent=11 // pred_check_branch
          %126 = sbr.rel (%p124) target = $region16
        $region15: #{tpu_custom_call.1} parent=11 // pred_region
          _
        $region16: #{tpu_custom_call.1} parent=11 // pred_fallthru
          _
        // Predicated region
        $region17: #{tpu_custom_call.1} parent=11 // pred_check
          %p127 = pneg %p83
        $region18: #{tpu_custom_call.1} parent=11 // pred_check_branch
          %129 = sbr.rel (%p127) target = $region20
        $region19: #{tpu_custom_call.1} parent=11 // pred_region
          _
        $region20: #{tpu_custom_call.1} parent=11 // pred_fallthru
          _
      $region12: #{tpu_custom_call.1} parent=5 // pred_fallthru
        _
      %p130 = scmp.lt.s32.totalorder %s15, 2
      // Predicated region
      $region21: #{tpu_custom_call.1} parent=5 // pred_check
        %p131 = pneg %p130
      $region22: #{tpu_custom_call.1} parent=5 // pred_check_branch
        %133 = sbr.rel (%p131) target = $region24
      $region23: #{tpu_custom_call.1} parent=5 // pred_region
        // Predicated region
        $region25: #{tpu_custom_call.1} parent=23 // pred_check
          %p134 = pneg %p35
        $region26: #{tpu_custom_call.1} parent=23 // pred_check_branch
          %136 = sbr.rel (%p134) target = $region28
        $region27: #{tpu_custom_call.1} parent=23 // pred_region
          %s137 = sand.u32 %s25, 1
          %s138 = scalar_lea.sflag [#allocation3], %s137
          %s139 = sand.u32 %s25, 1
          %s140 = smul.addr %s139, 8
          %s141 = scalar_lea.vmem [#allocation2], %s140
          %s143 = ssub.s32 128, 128
          %144 = vsyncadd %s138, %s143
          %s145 = smul.addr %s15, 128
          %s146 = scalar_lea.hbm %s0, %s145
          %s148 = sshll.u32 %s141, 4
          %s149 = int_to_ptr.vmem [resolvable:$true] %s148
          %151 = dma.hbm_to_vmem [thread:$0]  %s146, 128, %s149, %s138
        $region28: #{tpu_custom_call.1} parent=23 // pred_fallthru
          _
      $region24: #{tpu_custom_call.1} parent=5 // pred_fallthru
        _
      %p152 = scmp.le.s32.totalorder 1, %s15
      %p153 = scmp.lt.s32.totalorder %s15, 3
      %p154 = pnand %p152, %p153
      %p155 = pneg %p154
      // Predicated region
      $region29: #{tpu_custom_call.1} parent=5 // pred_check
        _
      $region30: #{tpu_custom_call.1} parent=5 // pred_check_branch
        %157 = sbr.rel (%p154) target = $region32
      $region31: #{tpu_custom_call.1} parent=5 // pred_region
        %s158 = ssub.s32 %s15, 1
        %s159 = sand.u32 %s28, 1
        %s160 = scalar_lea.sflag [#allocation3], %s159
        %s161 = sand.u32 %s28, 1
        %s162 = smul.addr %s161, 8
        %s163 = scalar_lea.vmem [#allocation2], %s162
        // Predicated region
        $region33: #{tpu_custom_call.1} parent=31 // pred_check
          %p164 = pneg %p41
        $region34: #{tpu_custom_call.1} parent=31 // pred_check_branch
          %166 = sbr.rel (%p164) target = $region36
        $region35: #{tpu_custom_call.1} parent=31 // pred_region
          %167 = dma.done %s160, 128
        $region36: #{tpu_custom_call.1} parent=31 // pred_fallthru
          _
        %s168 = sand.u32 %s28, 1
        %s169 = scalar_lea.sflag [#allocation3], %s168
        %s170 = sand.u32 %s28, 1
        %s171 = smul.addr %s170, 8
        %s172 = scalar_lea.vmem [#allocation2], %s171
        %p173 = pneg %p41
        %p174 = pneg %p38
        %p175 = pneg %p62
        %p176 = pneg %p59
        %p177 = pneg %p83
        %p178 = pneg %p80
        %p179 = pneg %p109
        %p180 = pneg %p106
        %s181 = sand.u32 %s96, 1
        %s182 = scalar_lea.sflag [#allocation4], %s181
        %s183 = sand.u32 %s96, 1
        %s184 = smul.addr %s183, 8
        %s185 = scalar_lea.vmem [#allocation5], %s184
        %v187 = vld [vmem:[%s163] sm:$0xff]
        %v188 = vpack.c.bf16 %v187, %v187
        %v189 = vld [vmem:[%s1] sm:$0x3]
        %vm190 = vcmask 261120
        %v192 = vsel %vm190, %v188, 0
        %v195 = vsel %vm190, %v189, 0
        %197 = vmatprep.subr.bf16.mxu0 0
        %198 = vmatpush1.bf16.xpose.msra.mxu0 %v195
        %199 = vmatprep.subr.bf16.mxu0 0
        %200 = vmatpush1.bf16.xpose.msra.mxu0 0
        %201 = vmatprep.subr.bf16.mxu0 0
        %202 = vmatpush1.bf16.xpose.msra.mxu0 0
        %203 = vmatprep.subr.bf16.mxu0 0
        %204 = vmatpush1.bf16.xpose.msra.mxu0 0
        %205 = vmatprep.subr.bf16.mxu0 0
        %206 = vmatpush1.bf16.xpose.msra.mxu0 0
        %207 = vmatprep.subr.bf16.mxu0 0
        %208 = vmatpush1.bf16.xpose.msra.mxu0 0
        %209 = vmatprep.subr.bf16.mxu0 0
        %210 = vmatpush1.bf16.xpose.msra.mxu0 0
        %211 = vmatprep.subr.bf16.mxu0 0
        %212 = vmatpush1.bf16.xpose.msra.mxu0 0
        %213 = vmatprep.subr.bf16.mxu0 0
        %214 = vmatpush1.bf16.xpose.msra.mxu0 0
        %215 = vmatprep.subr.bf16.mxu0 0
        %216 = vmatpush1.bf16.xpose.msra.mxu0 0
        %217 = vmatprep.subr.bf16.mxu0 0
        %218 = vmatpush1.bf16.xpose.msra.mxu0 0
        %219 = vmatprep.subr.bf16.mxu0 0
        %220 = vmatpush1.bf16.xpose.msra.mxu0 0
        %221 = vmatprep.subr.bf16.mxu0 0
        %222 = vmatpush1.bf16.xpose.msra.mxu0 0
        %223 = vmatprep.subr.bf16.mxu0 0
        %224 = vmatpush1.bf16.xpose.msra.mxu0 0
        %225 = vmatprep.subr.bf16.mxu0 0
        %226 = vmatpush1.bf16.xpose.msra.mxu0 0
        %227 = vmatprep.subr.bf16.mxu0 0
        %228 = vmatpush1.bf16.xpose.msra.mxu0 0
        %229 = vmatprep.mubr.bf16.mxu0 0
        %230 = vmatmul.mubr.bf16.gmra.mrb[0].mxu0 %v192
        %v231 = vpop.f32.mrb[0].mxu0
        %v232 = vadd.f32 0.0, %v231
        %v233 = vpop.f32.mrb[0].mxu0
        %v234 = vpop.f32.mrb[0].mxu0
        %v235 = vpop.f32.mrb[0].mxu0
        %236 = vdwg.mxu0
        %v237 = vmul.f32 %v232, 0.25
        %v238 = vpack.c.bf16 %v237, %v237
        %v239 = vld [vmem:[%s2] sm:$0x3]
        %vm240 = vcmask 31744
        %v242 = vsel %vm240, %v238, 0
        %vm244 = vcmask 1041408
        %v246 = vsel %vm244, %v239, 0
        %248 = vmatprep.subr.bf16.mxu0 0
        %249 = vmatpush1.bf16.msra.mxu0 %v246
        %250 = vmatprep.subr.bf16.mxu0 0
        %251 = vmatpush1.bf16.msra.mxu0 0
        %252 = vmatprep.subr.bf16.mxu0 0
        %253 = vmatpush1.bf16.msra.mxu0 0
        %254 = vmatprep.subr.bf16.mxu0 0
        %255 = vmatpush1.bf16.msra.mxu0 0
        %256 = vmatprep.subr.bf16.mxu0 0
        %257 = vmatpush1.bf16.msra.mxu0 0
        %258 = vmatprep.subr.bf16.mxu0 0
        %259 = vmatpush1.bf16.msra.mxu0 0
        %260 = vmatprep.subr.bf16.mxu0 0
        %261 = vmatpush1.bf16.msra.mxu0 0
        %262 = vmatprep.subr.bf16.mxu0 0
        %263 = vmatpush1.bf16.msra.mxu0 0
        %264 = vmatprep.subr.bf16.mxu0 0
        %265 = vmatpush1.bf16.msra.mxu0 0
        %266 = vmatprep.subr.bf16.mxu0 0
        %267 = vmatpush1.bf16.msra.mxu0 0
        %268 = vmatprep.subr.bf16.mxu0 0
        %269 = vmatpush1.bf16.msra.mxu0 0
        %270 = vmatprep.subr.bf16.mxu0 0
        %271 = vmatpush1.bf16.msra.mxu0 0
        %272 = vmatprep.subr.bf16.mxu0 0
        %273 = vmatpush1.bf16.msra.mxu0 0
        %274 = vmatprep.subr.bf16.mxu0 0
        %275 = vmatpush1.bf16.msra.mxu0 0
        %276 = vmatprep.subr.bf16.mxu0 0
        %277 = vmatpush1.bf16.msra.mxu0 0
        %278 = vmatprep.subr.bf16.mxu0 0
        %279 = vmatpush1.bf16.msra.mxu0 0
        %280 = vmatprep.mubr.bf16.mxu0 0
        %281 = vmatmul.mubr.bf16.gmra.mrb[0].mxu0 %v242
        %v282 = vpop.f32.mrb[0].mxu0
        %v283 = vadd.f32 0.0, %v282
        %v284 = vpop.f32.mrb[0].mxu0
        %v285 = vpop.f32.mrb[0].mxu0
        %v286 = vpop.f32.mrb[0].mxu0
        %287 = vdwg.mxu0
        %288 = vst.msk [vmem:[%s185] sm:$0xff] %vm190, %v283
        %s289 = sand.u32 %s96, 1
        %s290 = scalar_lea.sflag [#allocation4], %s289
        %s291 = sand.u32 %s96, 1
        %s292 = smul.addr %s291, 8
        %s293 = scalar_lea.vmem [#allocation5], %s292
        // Predicated region
        $region37: #{tpu_custom_call.1} parent=31 // pred_check
          %p294 = pneg %p106
        $region38: #{tpu_custom_call.1} parent=31 // pred_check_branch
          %296 = sbr.rel (%p294) target = $region40
        $region39: #{tpu_custom_call.1} parent=31 // pred_region
          %s298 = ssub.s32 128, 128
          %299 = vsyncadd %s290, %s298
          %s300 = smul.addr %s20, 128
          %s301 = scalar_lea.hbm %s3, %s300
          %s303 = sshll.u32 %s293, 4
          %s304 = int_to_ptr.vmem [resolvable:$true] %s303
          %306 = dma.vmem_to_hbm [thread:$0]  %s304, 128, %s301, %s290
        $region40: #{tpu_custom_call.1} parent=31 // pred_fallthru
          _
      $region32: #{tpu_custom_call.1} parent=5 // pred_fallthru
        _
      %p307 = scmp.le.s32.totalorder 2, %s15
      // Predicated region
      $region41: #{tpu_custom_call.1} parent=5 // pred_check
        %p308 = pneg %p307
      $region42: #{tpu_custom_call.1} parent=5 // pred_check_branch
        %310 = sbr.rel (%p308) target = $region44
      $region43: #{tpu_custom_call.1} parent=5 // pred_region
        %s311 = ssub.s32 %s15, 2
        // Predicated region
        $region45: #{tpu_custom_call.1} parent=43 // pred_check
          %p312 = pneg %p112
        $region46: #{tpu_custom_call.1} parent=43 // pred_check_branch
          %314 = sbr.rel (%p312) target = $region48
        $region47: #{tpu_custom_call.1} parent=43 // pred_region
          %s315 = sand.u32 %s97, 1
          %s316 = scalar_lea.sflag [#allocation4], %s315
          %s317 = sand.u32 %s97, 1
          %s318 = smul.addr %s317, 8
          %s319 = scalar_lea.vmem [#allocation5], %s318
          %320 = dma.done %s316, 128
        $region48: #{tpu_custom_call.1} parent=43 // pred_fallthru
          _
      $region44: #{tpu_custom_call.1} parent=5 // pred_fallthru
        _
    $region6: #{tpu_custom_call.1} parent=1 // loop_footer
      %s19 = sadd.s32 1, %s15
    $region7: #{tpu_custom_call.1} parent=1 // loop_footer_branch
      %14 = sbr.rel target = $region3
    $region8: #{tpu_custom_call.1} parent=1 // loop_exit
      _
    %321 = vsyncpa [#allocation3], 1
    %s322 = scalar_lea.sflag [#allocation3], 1
    %323 = vsyncpa %s322, 1
    %324 = vsyncpa [#allocation4], 1
    %s325 = scalar_lea.sflag [#allocation4], 1
    %326 = vsyncpa %s325, 1

</llo_original>
